<compile_context>
chip_gen: v5e
topology: v5e:2x2
jax: 0.10.0
libtpu: 0.0.40
codegen_flags: <defaults>
</compile_context>

<pallas_src>
import jax
import jax.numpy as jnp
from jax.experimental import pallas as pl
from jax.experimental.pallas import tpu as pltpu


def _round_up(x: int, m: int) -> int:
    return ((x + m - 1) // m) * m


def _frobenius_kernel(t_ref, h_ref, o_ref, acc_ref):
    """Grid: (batch_block b, feature_tile k).  k is the reduction axis.

    Per step: squared differences (VPU) + one lane reduce (XLU) into a
    (Bb, 1) f32 accumulator.  On the last feature tile: sqrt and store.
    """
    k = pl.program_id(1)

    @pl.when(k == 0)
    def _():
        acc_ref[...] = jnp.zeros_like(acc_ref)

    d = t_ref[...].astype(jnp.float32) - h_ref[...].astype(jnp.float32)
    acc_ref[...] += jnp.sum(d * d, axis=1, keepdims=True)

    @pl.when(k == pl.num_programs(1) - 1)
    def _():
        o_ref[...] = jnp.sqrt(acc_ref[...])


def frobenius_loss(s_target: jax.Array, s_hat: jax.Array) -> jax.Array:
    """Mean over batch of Frobenius norms of (s_target[b] - s_hat[b])."""
    assert s_target.shape == s_hat.shape
    assert s_target.ndim >= 2, "expected [B, ...] batched matrices"

    B = s_target.shape[0]
    F = 1
    for d in s_target.shape[1:]:
        F *= d

    # Flatten each matrix to a lane-dense row.
    t = s_target.reshape(B, F)
    h = s_hat.reshape(B, F)

    LANE, SUB = 128, 8
    # ~4 MiB of f32 per input tile; 2 inputs x 2 pipeline buffers -> ~16 MiB,
    # comfortably under the 32 MiB scoped VMEM limit on v5e/v6e/v7x.
    TARGET_ELEMS = 1024 * 1024

    F128 = _round_up(F, LANE)

    # Batch block size: pack many small matrices per step; keep one sublane
    # group for large matrices (the feature axis carries the tile volume).
    if B <= SUB:
        Bb = B  # block == full batch dim (satisfies the (8,128) rule)
    elif F128 >= TARGET_ELEMS:
        Bb = SUB
    else:
        Bb = min(_round_up(B, SUB), _round_up(TARGET_ELEMS // F128, SUB))

    # Feature tile: multiple of 128, sized so Bb*Ft*4B ~= 4 MiB.
    Ft = min(F128, _round_up(max(TARGET_ELEMS // Bb, LANE), LANE))

    B_pad = _round_up(B, Bb)
    F_pad = _round_up(F, Ft)

    # Zero padding contributes zero to the squared-difference sums; padded
    # batch rows (norm 0) are sliced off before the mean.
    t = jnp.pad(t, ((0, B_pad - B), (0, F_pad - F)))
    h = jnp.pad(h, ((0, B_pad - B), (0, F_pad - F)))

    grid = (B_pad // Bb, F_pad // Ft)
    itemsize = jnp.dtype(s_target.dtype).itemsize

    norms = pl.pallas_call(
        _frobenius_kernel,
        out_shape=jax.ShapeDtypeStruct((B_pad, 1), jnp.float32),
        grid_spec=pltpu.PrefetchScalarGridSpec(
            num_scalar_prefetch=0,
            grid=grid,
            in_specs=[
                pl.BlockSpec((Bb, Ft), lambda b, k: (b, k)),
                pl.BlockSpec((Bb, Ft), lambda b, k: (b, k)),
            ],
            # Output block depends only on the batch axis; constant across the
            # reduction axis (written once, on the last feature tile).
            out_specs=pl.BlockSpec((Bb, 1), lambda b, k: (b, 0)),
            scratch_shapes=[pltpu.VMEM((Bb, 1), jnp.float32)],
        ),
        compiler_params=pltpu.CompilerParams(
            dimension_semantics=("parallel", "arbitrary"),
            vmem_limit_bytes=32 * 1024 * 1024,
        ),
        cost_estimate=pl.CostEstimate(
            flops=3 * B_pad * F_pad,
            transcendentals=B_pad,
            bytes_accessed=2 * B_pad * F_pad * itemsize + B_pad * 4,
        ),
    )(t, h)

    # Mean over the real batch entries only.
    return jnp.mean(norms[:B, 0])


def _reference(s_target, s_hat):
    diff = (s_target - s_hat).astype(jnp.float32)
    red_axes = tuple(range(1, diff.ndim))
    return jnp.mean(jnp.sqrt(jnp.sum(diff * diff, axis=red_axes)))


if __name__ == "__main__":
    key = jax.random.PRNGKey(0)

    # Small shapes consistent with the module: batch of 2-D matrices.
    k1, k2 = jax.random.split(key)
    B, M, N = 2, 16, 16
    s_target = jax.random.normal(k1, (B, M, N), dtype=jnp.float32)
    s_hat = jax.random.normal(k2, (B, M, N), dtype=jnp.float32)

    loss = frobenius_loss(s_target, s_hat)
    jax.block_until_ready(loss)
    ref = _reference(s_target, s_hat)
    assert jnp.allclose(loss, ref, rtol=1e-5, atol=1e-5), (loss, ref)

    # Second check: non-lane-aligned matrix size (exercises feature padding).
    k3, k4 = jax.random.split(k2)
    s_target2 = jax.random.normal(k3, (3, 20, 24), dtype=jnp.float32)
    s_hat2 = jax.random.normal(k4, (3, 20, 24), dtype=jnp.float32)
    loss2 = frobenius_loss(s_target2, s_hat2)
    jax.block_until_ready(loss2)
    ref2 = _reference(s_target2, s_hat2)
    assert jnp.allclose(loss2, ref2, rtol=1e-5, atol=1e-5), (loss2, ref2)

    # Third check: batch > 8 (exercises batch blocking / padded rows).
    k5, k6 = jax.random.split(k4)
    s_target3 = jax.random.normal(k5, (10, 32, 48), dtype=jnp.float32)
    s_hat3 = jax.random.normal(k6, (10, 32, 48), dtype=jnp.float32)
    loss3 = frobenius_loss(s_target3, s_hat3)
    jax.block_until_ready(loss3)
    ref3 = _reference(s_target3, s_hat3)
    assert jnp.allclose(loss3, ref3, rtol=1e-5, atol=1e-5), (loss3, ref3)

    print("KERNEL_OK")
</pallas_src>

<mosaic_0001>
module attributes {stable_mosaic.version = 11 : i64} {
  func.func @_frobenius_kernel(%arg0: i32, %arg1: i32, %arg2: memref<2x256xf32, #tpu.memory_space<vmem>>, %arg3: memref<2x256xf32, #tpu.memory_space<vmem>>, %arg4: memref<2x1xf32, #tpu.memory_space<vmem>>, %arg5: memref<2x1xf32, #tpu.memory_space<vmem>>) attributes {dimension_semantics = [#tpu.dimension_semantics<parallel>, #tpu.dimension_semantics<arbitrary>], iteration_bounds = array<i64: 1, 1>, scalar_prefetch = 0 : i64, scratch_operands = 1 : i64, tpu.core_type = #tpu.core_type<tc>, window_params = [{transform_indices = @transform_0, window_bounds = array<i64: 2, 256>}, {transform_indices = @transform_1, window_bounds = array<i64: 2, 256>}, {transform_indices = @transform_2, window_bounds = array<i64: 2, 1>}]} {
    %c0_i32 = arith.constant 0 : i32
    %0 = arith.cmpi eq, %arg1, %c0_i32 : i32
    %1 = arith.extui %0 : i1 to i32
    %c0_i32_0 = arith.constant 0 : i32
    %2 = arith.cmpi ne, %1, %c0_i32_0 : i32
    scf.if %2 {
      %cst_10 = arith.constant 0.000000e+00 : f32
      %15 = vector.broadcast %cst_10 : f32 to vector<2x1xf32>
      %c0_11 = arith.constant 0 : index
      %c0_12 = arith.constant 0 : index
      %16 = vector.load %arg5[%c0_11, %c0_12] : memref<2x1xf32, #tpu.memory_space<vmem>>, vector<2x1xf32>
      tpu.vector_store %arg5[%c0_11, %c0_12], %15 {strides = array<i32>} : memref<2x1xf32, #tpu.memory_space<vmem>>, vector<2x1xf32>,
    } else {
    }
    %c0 = arith.constant 0 : index
    %c0_1 = arith.constant 0 : index
    %3 = vector.load %arg2[%c0, %c0_1] : memref<2x256xf32, #tpu.memory_space<vmem>>, vector<2x256xf32>
    %c0_2 = arith.constant 0 : index
    %c0_3 = arith.constant 0 : index
    %4 = vector.load %arg3[%c0_2, %c0_3] : memref<2x256xf32, #tpu.memory_space<vmem>>, vector<2x256xf32>
    %5 = arith.subf %3, %4 : vector<2x256xf32>
    %c0_4 = arith.constant 0 : index
    %c0_5 = arith.constant 0 : index
    %6 = vector.load %arg5[%c0_4, %c0_5] : memref<2x1xf32, #tpu.memory_space<vmem>>, vector<2x1xf32>
    %7 = arith.mulf %5, %5 : vector<2x256xf32>
    %cst = arith.constant dense<0.000000e+00> : vector<2xf32>
    %8 = vector.multi_reduction <add>, %7, %cst [1] : vector<2x256xf32> to vector<2xf32>
    %9 = vector.shape_cast %8 : vector<2xf32> to vector<2x1xf32>
    %10 = arith.addf %6, %9 : vector<2x1xf32>
    %c0_6 = arith.constant 0 : index
    %c0_7 = arith.constant 0 : index
    %11 = vector.load %arg5[%c0_6, %c0_7] : memref<2x1xf32, #tpu.memory_space<vmem>>, vector<2x1xf32>
    tpu.vector_store %arg5[%c0_6, %c0_7], %10 {strides = array<i32>} : memref<2x1xf32, #tpu.memory_space<vmem>>, vector<2x1xf32>,
    %c0_i32_8 = arith.constant 0 : i32
    %12 = arith.cmpi eq, %arg1, %c0_i32_8 : i32
    %13 = arith.extui %12 : i1 to i32
    %c0_i32_9 = arith.constant 0 : i32
    %14 = arith.cmpi ne, %13, %c0_i32_9 : i32
    scf.if %14 {
      %c0_10 = arith.constant 0 : index
      %c0_11 = arith.constant 0 : index
      %15 = vector.load %arg5[%c0_10, %c0_11] : memref<2x1xf32, #tpu.memory_space<vmem>>, vector<2x1xf32>
      %16 = math.sqrt %15 : vector<2x1xf32>
      %c0_12 = arith.constant 0 : index
      %c0_13 = arith.constant 0 : index
      %17 = vector.load %arg4[%c0_12, %c0_13] : memref<2x1xf32, #tpu.memory_space<vmem>>, vector<2x1xf32>
      tpu.vector_store %arg4[%c0_12, %c0_13], %16 {strides = array<i32>} : memref<2x1xf32, #tpu.memory_space<vmem>>, vector<2x1xf32>,
    } else {
    }
    return
  }
  func.func @transform_0(%arg0: i32, %arg1: i32) -> (i32, i32) {
    %c0_i32 = arith.constant 0 : i32
    return %arg0, %arg1 : i32, i32
  }
  func.func @transform_1(%arg0: i32, %arg1: i32) -> (i32, i32) {
    %c0_i32 = arith.constant 0 : i32
    return %arg0, %arg1 : i32, i32
  }
  func.func @transform_2(%arg0: i32, %arg1: i32) -> (i32, i32) {
    %c0_i32 = arith.constant 0 : i32
    %c0_i32_0 = arith.constant 0 : i32
    return %arg0, %c0_i32 : i32, i32
  }
}

</mosaic_0001>

<llo_original>
// kernel: tpu_custom_call.1
$region0: #{tpu_custom_call.1}
  #allocation0 [shape = 'u32[]', space=smem, size = 0x4, offset = 0x4, fixed_abs, tag = 'smem constant byte address 0x4 - core index']
  #allocation1 [shape = 'u32[72,128]{1,0:T(1,128)}', space=vmem, size = 0x9000, scoped, tag = 'internal scratch']
  #allocation2 [shape = 'f32[2,1]{1,0:T(2,128)}', space=vmem, size = 0x400, scoped, tag = 'scratch operand']
  %s0 = inlined_call_operand.hbm [shape: f32[2,256], index: 0, kind: input, shape index: {}]
  %s1 = inlined_call_operand.hbm [shape: f32[2,256], index: 1, kind: input, shape index: {}]
  %s2 = inlined_call_operand.vmem [shape: f32[2,1], index: 2, kind: output, shape index: {}]
  %s3 = sld [smem:[#allocation0]]
  $region34: #{tpu_custom_call.1} parent=0
    _
  %s5 = ssub.s32 1, %s3
  %s6 = scalar_select 0, %s5, %s3
  $region1: #{tpu_custom_call.1} parent=0
    #allocation3 [shape = 'u8[2048]{0}', space=vmem, size = 0x800, scoped, tag = 'input window, operand 0, single buffered']
    #allocation4 [shape = 's32[1]{0}', space=sflag, size = 0x4, scoped, tag = 'scoped memory for tpu_custom_call.1']
    #allocation5 [shape = 'u8[2048]{0}', space=vmem, size = 0x800, scoped, tag = 'input window, operand 1, single buffered']
    #allocation6 [shape = 's32[1]{0}', space=sflag, size = 0x4, scoped, tag = 'scoped memory for tpu_custom_call.1']
    %7 = vsyncpa [#allocation4], 0
    %8 = vsyncpa [#allocation6], 0
    // Predicated region
    $region2: #{tpu_custom_call.1} parent=1 // pred_check
      _
    $region3: #{tpu_custom_call.1} parent=1 // pred_check_branch
      %10 = sbr.rel (0) target = $region5
    $region4: #{tpu_custom_call.1} parent=1 // pred_region
      %12 = vsyncadd [#allocation4], 0
      %s14 = sshll.u32 %s0, 4
      %s15 = int_to_ptr.hbm [resolvable:$true] %s14
      %s16 = sshll.u32 [#allocation3], 4
      %s17 = int_to_ptr.vmem [resolvable:$true] %s16
      %19 = dma.hbm_to_vmem [thread:$0]  %s15, 64, %s17, [#allocation4]
    $region5: #{tpu_custom_call.1} parent=1 // pred_fallthru
      _
    // Predicated region
    $region6: #{tpu_custom_call.1} parent=1 // pred_check
      _
    $region7: #{tpu_custom_call.1} parent=1 // pred_check_branch
      %21 = sbr.rel (0) target = $region9
    $region8: #{tpu_custom_call.1} parent=1 // pred_region
      %23 = vsyncadd [#allocation6], 0
      %s25 = sshll.u32 %s1, 4
      %s26 = int_to_ptr.hbm [resolvable:$true] %s25
      %s27 = sshll.u32 [#allocation5], 4
      %s28 = int_to_ptr.vmem [resolvable:$true] %s27
      %30 = dma.hbm_to_vmem [thread:$0]  %s26, 64, %s28, [#allocation6]
    $region9: #{tpu_custom_call.1} parent=1 // pred_fallthru
      _
    // Predicated region
    $region10: #{tpu_custom_call.1} parent=1 // pred_check
      _
    $region11: #{tpu_custom_call.1} parent=1 // pred_check_branch
      %32 = sbr.rel (0) target = $region13
    $region12: #{tpu_custom_call.1} parent=1 // pred_region
      %34 = dma.done [#allocation4], 64
    $region13: #{tpu_custom_call.1} parent=1 // pred_fallthru
      _
    // Predicated region
    $region14: #{tpu_custom_call.1} parent=1 // pred_check
      _
    $region15: #{tpu_custom_call.1} parent=1 // pred_check_branch
      %36 = sbr.rel (0) target = $region17
    $region16: #{tpu_custom_call.1} parent=1 // pred_region
      %38 = dma.done [#allocation6], 64
    $region17: #{tpu_custom_call.1} parent=1 // pred_fallthru
      _
    %p39 = scmp.eq.s32.totalorder 0, 0
    // Predicated region
    $region18: #{tpu_custom_call.1} parent=1 // pred_check
      %p40 = pneg %p39
    $region19: #{tpu_custom_call.1} parent=1 // pred_check_branch
      %42 = sbr.rel (%p40) target = $region21
    $region20: #{tpu_custom_call.1} parent=1 // pred_region
      %vm43 = vcmask 1024
      %44 = vst.msk [vmem:[#allocation2] sm:$0x3] %vm43, 0.0
    $region21: #{tpu_custom_call.1} parent=1 // pred_fallthru
      _
    %v45 = vld [vmem:[#allocation3] sm:$0xf]
    %v46 = vld [vmem:[#allocation5] sm:$0xf]
    %v47 = vsub.f32 %v45, %v46
    %v48 = vld [vmem:[#allocation2] sm:$0x3]
    %v49 = vmul.f32 %v47, %v47
    %51 = vst [vmem:[#allocation1] ss:$4 sm:$0xff] %v49
    %v52 = vld.sshfl [vmem:[#allocation1] sm:$0xff pattern:$0x73625140]
    %v53 = vld.sshfl [vmem:[#allocation1 + $0x8] sm:$0xff pattern:$0x73625140]
    %vm56 = vcmask 1041408
    %v57 = vsel %vm56, %v52, 0.0
    %v58 = vsel %vm56, %v53, 0.0
    %v59 = vadd.f32 %v57, %v58
    %60 = vadd.xlane.f32.xlu0 %v59
    %v61 = vpop.xlane.xlu0 %60
    %v62 = vadd.f32 %v48, %v61
    %vm63 = vcmask 1024
    %64 = vst.msk [vmem:[#allocation2] sm:$0x3] %vm63, %v62
    // Predicated region
    $region22: #{tpu_custom_call.1} parent=1 // pred_check
      %p65 = pneg %p39
    $region23: #{tpu_custom_call.1} parent=1 // pred_check_branch
      %67 = sbr.rel (%p65) target = $region25
    $region24: #{tpu_custom_call.1} parent=1 // pred_region
      %v68 = vld [vmem:[#allocation2] sm:$0x3]
      %v69 = vrsqrt.pop %v68
      %v70 = vmul.f32 %v69, %v68
      %v71 = vmul.f32 %v70, %v69
      %v72 = vmul.f32 0.5, %v71
      %v73 = vsub.f32 1.5, %v72
      %v74 = vmul.f32 %v69, %v73
      %v75 = vmul.f32 %v68, %v74
      %vm76 = vcmp.eq.f32.partialorder %v68, inf
      %v77 = vsel %vm76, %v68, %v75
      %vm78 = vcmp.eq.f32.partialorder %v68, 0.0
      %v79 = vand.u32 %v68, 2147483648
      %v80 = vsel %vm78, %v79, %v77
      %81 = vst.msk [vmem:[%s2] sm:$0x3] %vm63, %v80
    $region25: #{tpu_custom_call.1} parent=1 // pred_fallthru
      _
    // Predicated region
    $region26: #{tpu_custom_call.1} parent=1 // pred_check
      _
    $region27: #{tpu_custom_call.1} parent=1 // pred_check_branch
      %83 = sbr.rel (0) target = $region29
    $region28: #{tpu_custom_call.1} parent=1 // pred_region
      _
    $region29: #{tpu_custom_call.1} parent=1 // pred_fallthru
      _
    // Predicated region
    $region30: #{tpu_custom_call.1} parent=1 // pred_check
      _
    $region31: #{tpu_custom_call.1} parent=1 // pred_check_branch
      %85 = sbr.rel (0) target = $region33
    $region32: #{tpu_custom_call.1} parent=1 // pred_region
      _
    $region33: #{tpu_custom_call.1} parent=1 // pred_fallthru
      _
    %86 = vsyncpa [#allocation4], 1
    %87 = vsyncpa [#allocation6], 1

</llo_original>
